<compile_context>
chip_gen: v5e
topology: v5e:2x2
jax: 0.10.0
libtpu: 0.0.40
codegen_flags: <defaults>
</compile_context>

<pallas_src>
import math

import jax
import jax.numpy as jnp
from jax.experimental import pallas as pl
from jax.experimental.pallas import tpu as pltpu


def _round_up(x, m):
    return ((x + m - 1) // m) * m


def _gelu_new(x):
    # GPT-2 "gelu_new": 0.5*x*(1+tanh(sqrt(2/pi)*(x+0.044715*x^3))), in f32.
    c = math.sqrt(2.0 / math.pi)
    return 0.5 * x * (1.0 + jnp.tanh(c * (x + 0.044715 * x * x * x)))


def _mlp_kernel(x_ref, w1_ref, b1_ref, w2_ref, b2_ref, o_ref, acc_ref):
    # x_ref:  [tm, n_embd]       (resident across the k axis)
    # w1_ref: [n_embd, tk]   b1_ref: [1, tk]
    # w2_ref: [tk, n_embd]   b2_ref: [1, n_embd]
    # o_ref:  [tm, n_embd]   acc_ref: [tm, n_embd] f32 scratch
    k = pl.program_id(1)

    @pl.when(k == 0)
    def _():
        acc_ref[...] = jnp.zeros_like(acc_ref)

    # First matmul on the MXU (f32 accumulation), bias + gelu_new in f32
    # (VPU/EUP work; v5e has no bf16 elementwise path).
    h = jnp.dot(x_ref[...], w1_ref[...], preferred_element_type=jnp.float32)
    h = _gelu_new(h + b1_ref[...])

    # Second matmul: accumulate this intermediate chunk's contribution.
    acc_ref[...] += jnp.dot(h.astype(w2_ref.dtype), w2_ref[...],
                            preferred_element_type=jnp.float32)

    @pl.when(k == pl.num_programs(1) - 1)
    def _():
        o_ref[...] = (acc_ref[...] + b2_ref[...]).astype(o_ref.dtype)
    # TODO(synk): dropout (resid_pdrop) is identity in eval; a training version
    # would seed pltpu.prng_seed + pltpu.prng_random_bits and mask/scale here.


def linglong_mlp(hidden_states, w_fc, b_fc, w_proj, b_proj, *,
                 tm=256, tk=512, compute_dtype=jnp.bfloat16):
    """hidden_states: [B, S, n_embd] -> [B, S, n_embd]."""
    B, S, n_embd = hidden_states.shape
    inter = w_fc.shape[1]
    M = B * S
    out_dtype = hidden_states.dtype

    # --- tile-size selection --------------------------------------------------
    # M tile: big (MXU wants >=128 rows at real sizes), clamped to the
    # (8-rounded) problem so tiny inputs don't pad all the way to 256 rows.
    tm = _round_up(max(8, min(tm, _round_up(M, 8))), 8)
    # Intermediate chunk: lane-aligned divisor of `inter`, else the full dim
    # (small models keep the whole weight resident anyway).
    tk = next((c for c in (tk, 512, 256, 128)
               if c % 128 == 0 and 128 <= c <= inter and inter % c == 0), inter)

    m_pad = _round_up(M, tm)

    x = hidden_states.reshape(M, n_embd).astype(compute_dtype)
    if m_pad != M:
        x = jnp.pad(x, ((0, m_pad - M), (0, 0)))
    w1 = w_fc.astype(compute_dtype)
    w2 = w_proj.astype(compute_dtype)
    b1 = b_fc.reshape(1, inter).astype(jnp.float32)
    b2 = b_proj.reshape(1, n_embd).astype(jnp.float32)

    grid = (m_pad // tm, inter // tk)

    # --- VMEM budget / cost hint ----------------------------------------------
    cb = jnp.dtype(compute_dtype).itemsize
    ob = jnp.dtype(out_dtype).itemsize
    vmem_needed = (
        2 * tm * n_embd * cb          # x tiles (double-buffered)
        + 2 * n_embd * tk * cb        # W1 chunks
        + 2 * tk * n_embd * cb        # W2 chunks
        + 2 * (tk + n_embd) * 4       # bias chunks
        + 2 * tm * n_embd * ob        # output tiles
        + tm * n_embd * 4             # f32 accumulator scratch
        + tm * tk * 4                 # gelu intermediate (spill headroom)
    )
    vmem_limit = int(min(max(vmem_needed * 3 // 2, 32 * 1024 * 1024),
                         64 * 1024 * 1024))

    cost = pl.CostEstimate(
        flops=2 * 2 * M * n_embd * inter,
        transcendentals=M * inter,
        bytes_accessed=(x.size * cb + w1.size * cb + w2.size * cb
                        + b1.size * 4 + b2.size * 4 + M * n_embd * ob),
    )

    out = pl.pallas_call(
        _mlp_kernel,
        out_shape=jax.ShapeDtypeStruct((m_pad, n_embd), out_dtype),
        grid_spec=pltpu.PrefetchScalarGridSpec(
            num_scalar_prefetch=0,
            grid=grid,
            in_specs=[
                pl.BlockSpec((tm, n_embd), lambda i, k: (i, 0)),   # x (resident over k)
                pl.BlockSpec((n_embd, tk), lambda i, k: (0, k)),   # W1 chunk
                pl.BlockSpec((1, tk), lambda i, k: (0, k)),        # b1 chunk
                pl.BlockSpec((tk, n_embd), lambda i, k: (k, 0)),   # W2 chunk
                pl.BlockSpec((1, n_embd), lambda i, k: (0, 0)),    # b2
            ],
            out_specs=pl.BlockSpec((tm, n_embd), lambda i, k: (i, 0)),
            scratch_shapes=[pltpu.VMEM((tm, n_embd), jnp.float32)],
        ),
        compiler_params=pltpu.CompilerParams(
            dimension_semantics=("parallel", "arbitrary"),
            vmem_limit_bytes=vmem_limit,
        ),
        cost_estimate=cost,
    )(x, w1, b1, w2, b2)

    if m_pad != M:
        out = out[:M]
    return out.reshape(B, S, n_embd)


def _reference(hidden_states, w_fc, b_fc, w_proj, b_proj):
    h = hidden_states @ w_fc + b_fc
    h = _gelu_new(h)
    return h @ w_proj + b_proj


if __name__ == "__main__":
    # Small config consistent with the module: n_embd=32, intermediate=4*n_embd.
    batch, seq, n_embd = 2, 8, 32
    intermediate = 4 * n_embd  # 128

    key = jax.random.PRNGKey(0)
    k_x, k_w1, k_w2 = jax.random.split(key, 3)

    x = jax.random.normal(k_x, (batch, seq, n_embd), dtype=jnp.float32)
    # Conv1D init: weight ~ N(0, 0.02), bias = 0 (deterministic via PRNGKey).
    w_fc = 0.02 * jax.random.normal(k_w1, (n_embd, intermediate), dtype=jnp.float32)
    b_fc = jnp.zeros((intermediate,), dtype=jnp.float32)
    w_proj = 0.02 * jax.random.normal(k_w2, (intermediate, n_embd), dtype=jnp.float32)
    b_proj = jnp.zeros((n_embd,), dtype=jnp.float32)

    ref = _reference(x, w_fc, b_fc, w_proj, b_proj)

    # 1) f32 compute path: bit-faithful to the f32 reference.
    out_f32 = jax.block_until_ready(
        linglong_mlp(x, w_fc, b_fc, w_proj, b_proj, compute_dtype=jnp.float32))
    assert out_f32.shape == (batch, seq, n_embd)
    assert jnp.allclose(out_f32, ref, atol=1e-5, rtol=1e-5)

    # 2) Default path: bf16 MXU operands, f32 accumulation (looser tolerance).
    out_bf16 = jax.block_until_ready(linglong_mlp(x, w_fc, b_fc, w_proj, b_proj))
    assert out_bf16.shape == (batch, seq, n_embd)
    assert jnp.allclose(out_bf16, ref, atol=3e-2, rtol=3e-2)

    # 3) Ragged M (B*S not a multiple of the row tile) exercises pad/slice path.
    x_odd = x[:, :5, :]  # M = 10
    ref_odd = _reference(x_odd, w_fc, b_fc, w_proj, b_proj)
    out_odd = jax.block_until_ready(
        linglong_mlp(x_odd, w_fc, b_fc, w_proj, b_proj, compute_dtype=jnp.float32))
    assert out_odd.shape == (batch, 5, n_embd)
    assert jnp.allclose(out_odd, ref_odd, atol=1e-5, rtol=1e-5)

    print("KERNEL_OK")
</pallas_src>

<mosaic_0001>
module attributes {stable_mosaic.version = 11 : i64} {
  func.func @_mlp_kernel(%arg0: i32, %arg1: i32, %arg2: memref<16x32xf32, #tpu.memory_space<vmem>>, %arg3: memref<32x128xf32, #tpu.memory_space<vmem>>, %arg4: memref<1x128xf32, #tpu.memory_space<vmem>>, %arg5: memref<128x32xf32, #tpu.memory_space<vmem>>, %arg6: memref<1x32xf32, #tpu.memory_space<vmem>>, %arg7: memref<16x32xf32, #tpu.memory_space<vmem>>, %arg8: memref<16x32xf32, #tpu.memory_space<vmem>>) attributes {dimension_semantics = [#tpu.dimension_semantics<parallel>, #tpu.dimension_semantics<arbitrary>], iteration_bounds = array<i64: 1, 1>, scalar_prefetch = 0 : i64, scratch_operands = 1 : i64, tpu.core_type = #tpu.core_type<tc>, window_params = [{transform_indices = @transform_0, window_bounds = array<i64: 16, 32>}, {transform_indices = @transform_1, window_bounds = array<i64: 32, 128>}, {transform_indices = @transform_2, window_bounds = array<i64: 1, 128>}, {transform_indices = @transform_3, window_bounds = array<i64: 128, 32>}, {pipeline_mode = #tpu.pipeline_mode<synchronous>, transform_indices = @transform_4, window_bounds = array<i64: 1, 32>}, {transform_indices = @transform_5, window_bounds = array<i64: 16, 32>}]} {
    %c0_i32 = arith.constant 0 : i32
    %0 = arith.cmpi eq, %arg1, %c0_i32 : i32
    %1 = arith.extui %0 : i1 to i32
    %c0_i32_0 = arith.constant 0 : i32
    %2 = arith.cmpi ne, %1, %c0_i32_0 : i32
    scf.if %2 {
      %cst_19 = arith.constant 0.000000e+00 : f32
      %30 = vector.broadcast %cst_19 : f32 to vector<16x32xf32>
      %c0_20 = arith.constant 0 : index
      %c0_21 = arith.constant 0 : index
      %31 = vector.load %arg8[%c0_20, %c0_21] : memref<16x32xf32, #tpu.memory_space<vmem>>, vector<16x32xf32>
      tpu.vector_store %arg8[%c0_20, %c0_21], %30 {strides = array<i32>} : memref<16x32xf32, #tpu.memory_space<vmem>>, vector<16x32xf32>,
    } else {
    }
    %c0 = arith.constant 0 : index
    %c0_1 = arith.constant 0 : index
    %3 = vector.load %arg2[%c0, %c0_1] : memref<16x32xf32, #tpu.memory_space<vmem>>, vector<16x32xf32>
    %c0_2 = arith.constant 0 : index
    %c0_3 = arith.constant 0 : index
    %4 = vector.load %arg3[%c0_2, %c0_3] : memref<32x128xf32, #tpu.memory_space<vmem>>, vector<32x128xf32>
    %cst = arith.constant dense<0.000000e+00> : vector<16x128xf32>
    %5 = tpu.matmul %3, %4, %cst {dimension_numbers = #tpu.dot_dimension_numbers<[1], [0], [0], [1], [0, 0, 1, 1], [], []>} : vector<16x32xf32>, vector<32x128xf32>, vector<16x128xf32> -> vector<16x128xf32>
    %c0_4 = arith.constant 0 : index
    %c0_5 = arith.constant 0 : index
    %6 = vector.load %arg4[%c0_4, %c0_5] : memref<1x128xf32, #tpu.memory_space<vmem>>, vector<1x128xf32>
    %7 = vector.broadcast %6 : vector<1x128xf32> to vector<16x128xf32>
    %8 = arith.addf %5, %7 : vector<16x128xf32>
    %cst_6 = arith.constant 5.000000e-01 : f32
    %9 = vector.broadcast %cst_6 : f32 to vector<16x128xf32>
    %10 = arith.mulf %9, %8 : vector<16x128xf32>
    %cst_7 = arith.constant 4.471500e-02 : f32
    %11 = vector.broadcast %cst_7 : f32 to vector<16x128xf32>
    %12 = arith.mulf %11, %8 : vector<16x128xf32>
    %13 = arith.mulf %12, %8 : vector<16x128xf32>
    %14 = arith.mulf %13, %8 : vector<16x128xf32>
    %15 = arith.addf %8, %14 : vector<16x128xf32>
    %cst_8 = arith.constant 0.797884583 : f32
    %16 = vector.broadcast %cst_8 : f32 to vector<16x128xf32>
    %17 = arith.mulf %16, %15 : vector<16x128xf32>
    %18 = math.tanh %17 : vector<16x128xf32>
    %cst_9 = arith.constant 1.000000e+00 : f32
    %19 = vector.broadcast %cst_9 : f32 to vector<16x128xf32>
    %20 = arith.addf %19, %18 : vector<16x128xf32>
    %21 = arith.mulf %10, %20 : vector<16x128xf32>
    %c0_10 = arith.constant 0 : index
    %c0_11 = arith.constant 0 : index
    %22 = vector.load %arg8[%c0_10, %c0_11] : memref<16x32xf32, #tpu.memory_space<vmem>>, vector<16x32xf32>
    %c0_12 = arith.constant 0 : index
    %c0_13 = arith.constant 0 : index
    %23 = vector.load %arg5[%c0_12, %c0_13] : memref<128x32xf32, #tpu.memory_space<vmem>>, vector<128x32xf32>
    %cst_14 = arith.constant dense<0.000000e+00> : vector<16x32xf32>
    %24 = tpu.matmul %21, %23, %cst_14 {dimension_numbers = #tpu.dot_dimension_numbers<[1], [0], [0], [1], [0, 0, 1, 1], [], []>} : vector<16x128xf32>, vector<128x32xf32>, vector<16x32xf32> -> vector<16x32xf32>
    %25 = arith.addf %22, %24 : vector<16x32xf32>
    %c0_15 = arith.constant 0 : index
    %c0_16 = arith.constant 0 : index
    %26 = vector.load %arg8[%c0_15, %c0_16] : memref<16x32xf32, #tpu.memory_space<vmem>>, vector<16x32xf32>
    tpu.vector_store %arg8[%c0_15, %c0_16], %25 {strides = array<i32>} : memref<16x32xf32, #tpu.memory_space<vmem>>, vector<16x32xf32>,
    %c0_i32_17 = arith.constant 0 : i32
    %27 = arith.cmpi eq, %arg1, %c0_i32_17 : i32
    %28 = arith.extui %27 : i1 to i32
    %c0_i32_18 = arith.constant 0 : i32
    %29 = arith.cmpi ne, %28, %c0_i32_18 : i32
    scf.if %29 {
      %c0_19 = arith.constant 0 : index
      %c0_20 = arith.constant 0 : index
      %30 = vector.load %arg8[%c0_19, %c0_20] : memref<16x32xf32, #tpu.memory_space<vmem>>, vector<16x32xf32>
      %c0_21 = arith.constant 0 : index
      %c0_22 = arith.constant 0 : index
      %31 = vector.load %arg6[%c0_21, %c0_22] : memref<1x32xf32, #tpu.memory_space<vmem>>, vector<1x32xf32>
      %32 = vector.broadcast %31 : vector<1x32xf32> to vector<16x32xf32>
      %33 = arith.addf %30, %32 : vector<16x32xf32>
      %c0_23 = arith.constant 0 : index
      %c0_24 = arith.constant 0 : index
      %34 = vector.load %arg7[%c0_23, %c0_24] : memref<16x32xf32, #tpu.memory_space<vmem>>, vector<16x32xf32>
      tpu.vector_store %arg7[%c0_23, %c0_24], %33 {strides = array<i32>} : memref<16x32xf32, #tpu.memory_space<vmem>>, vector<16x32xf32>,
    } else {
    }
    return
  }
  func.func @transform_0(%arg0: i32, %arg1: i32) -> (i32, i32) {
    %c0_i32 = arith.constant 0 : i32
    %c0_i32_0 = arith.constant 0 : i32
    return %arg0, %c0_i32 : i32, i32
  }
  func.func @transform_1(%arg0: i32, %arg1: i32) -> (i32, i32) {
    %c0_i32 = arith.constant 0 : i32
    %c0_i32_0 = arith.constant 0 : i32
    return %c0_i32, %arg1 : i32, i32
  }
  func.func @transform_2(%arg0: i32, %arg1: i32) -> (i32, i32) {
    %c0_i32 = arith.constant 0 : i32
    %c0_i32_0 = arith.constant 0 : i32
    return %c0_i32, %arg1 : i32, i32
  }
  func.func @transform_3(%arg0: i32, %arg1: i32) -> (i32, i32) {
    %c0_i32 = arith.constant 0 : i32
    %c0_i32_0 = arith.constant 0 : i32
    return %arg1, %c0_i32 : i32, i32
  }
  func.func @transform_4(%arg0: i32, %arg1: i32) -> (i32, i32) {
    %c0_i32 = arith.constant 0 : i32
    %c0_i32_0 = arith.constant 0 : i32
    %c0_i32_1 = arith.constant 0 : i32
    return %c0_i32, %c0_i32_0 : i32, i32
  }
  func.func @transform_5(%arg0: i32, %arg1: i32) -> (i32, i32) {
    %c0_i32 = arith.constant 0 : i32
    %c0_i32_0 = arith.constant 0 : i32
    return %arg0, %c0_i32 : i32, i32
  }
}

</mosaic_0001>

<llo_original>
// kernel: tpu_custom_call.1
$region0: #{tpu_custom_call.1}
  #allocation0 [shape = 'u32[]', space=smem, size = 0x4, offset = 0x4, fixed_abs, tag = 'smem constant byte address 0x4 - core index']
  #allocation1 [shape = 'u32[72,128]{1,0:T(1,128)}', space=vmem, size = 0x9000, scoped, tag = 'internal scratch']
  #allocation2 [shape = 'f32[16,32]{1,0:T(8,128)}', space=vmem, size = 0x2000, scoped, tag = 'scratch operand']
  %s0 = inlined_call_operand.vmem [shape: f32[16,32], index: 0, kind: input, shape index: {}]
  %s1 = inlined_call_operand.vmem [shape: f32[32,128], index: 1, kind: input, shape index: {}]
  %s2 = inlined_call_operand.vmem [shape: f32[1,128], index: 2, kind: input, shape index: {}]
  %s3 = inlined_call_operand.vmem [shape: f32[128,32], index: 3, kind: input, shape index: {}]
  %s4 = inlined_call_operand.vmem [shape: f32[1,32], index: 4, kind: input, shape index: {}]
  %s5 = inlined_call_operand.hbm [shape: f32[16,32], index: 5, kind: output, shape index: {}]
  %s6 = sld [smem:[#allocation0]]
  $region38: #{tpu_custom_call.1} parent=0
    _
  %s8 = ssub.s32 1, %s6
  %s9 = scalar_select 0, %s8, %s6
  $region1: #{tpu_custom_call.1} parent=0
    #allocation3 [shape = 'u8[8192]{0}', space=vmem, size = 0x2000, scoped, tag = 'output window, operand 0, single buffered']
    #allocation4 [shape = 's32[1]{0}', space=sflag, size = 0x4, scoped, tag = 'scoped memory for tpu_custom_call.1']
    %10 = vsyncpa [#allocation4], 0
    // Predicated region
    $region2: #{tpu_custom_call.1} parent=1 // pred_check
      _
    $region3: #{tpu_custom_call.1} parent=1 // pred_check_branch
      %12 = sbr.rel (0) target = $region5
    $region4: #{tpu_custom_call.1} parent=1 // pred_region
      _
    $region5: #{tpu_custom_call.1} parent=1 // pred_fallthru
      _
    // Predicated region
    $region6: #{tpu_custom_call.1} parent=1 // pred_check
      _
    $region7: #{tpu_custom_call.1} parent=1 // pred_check_branch
      %14 = sbr.rel (0) target = $region9
    $region8: #{tpu_custom_call.1} parent=1 // pred_region
      _
    $region9: #{tpu_custom_call.1} parent=1 // pred_fallthru
      _
    // Predicated region
    $region10: #{tpu_custom_call.1} parent=1 // pred_check
      _
    $region11: #{tpu_custom_call.1} parent=1 // pred_check_branch
      %16 = sbr.rel (0) target = $region13
    $region12: #{tpu_custom_call.1} parent=1 // pred_region
      _
    $region13: #{tpu_custom_call.1} parent=1 // pred_fallthru
      _
    // Predicated region
    $region14: #{tpu_custom_call.1} parent=1 // pred_check
      _
    $region15: #{tpu_custom_call.1} parent=1 // pred_check_branch
      %18 = sbr.rel (0) target = $region17
    $region16: #{tpu_custom_call.1} parent=1 // pred_region
      _
    $region17: #{tpu_custom_call.1} parent=1 // pred_fallthru
      _
    // Predicated region
    $region18: #{tpu_custom_call.1} parent=1 // pred_check
      _
    $region19: #{tpu_custom_call.1} parent=1 // pred_check_branch
      %20 = sbr.rel (0) target = $region21
    $region20: #{tpu_custom_call.1} parent=1 // pred_region
      _
    $region21: #{tpu_custom_call.1} parent=1 // pred_fallthru
      _
    %p21 = scmp.eq.s32.totalorder 0, 0
    // Predicated region
    $region22: #{tpu_custom_call.1} parent=1 // pred_check
      %p22 = pneg %p21
    $region23: #{tpu_custom_call.1} parent=1 // pred_check_branch
      %24 = sbr.rel (%p22) target = $region25
    $region24: #{tpu_custom_call.1} parent=1 // pred_region
      %vm25 = vcmask 261120
      %26 = vst.msk [vmem:[#allocation2] sm:$0xff] %vm25, 0.0
      %27 = vst.msk [vmem:[#allocation2 + $0x8] sm:$0xff] %vm25, 0.0
    $region25: #{tpu_custom_call.1} parent=1 // pred_fallthru
      _
    %v28 = vld [vmem:[%s0] sm:$0xff]
    %v29 = vld [vmem:[%s0 + $0x8] sm:$0xff]
    %v30 = vld [vmem:[%s1] sm:$0xff]
    %v31 = vld [vmem:[%s1 + $0x8] sm:$0xff]
    %v32 = vld [vmem:[%s1 + $0x10] sm:$0xff]
    %v33 = vld [vmem:[%s1 + $0x18] sm:$0xff]
    %v34 = vld [vmem:[%s2] sm:$0x1]
    %v36 = vperm.slane %v34, 0
    %vm38 = vcmask 261120
    %v40 = vsel %vm38, %v28, 0
    %v43 = vsel %vm38, %v29, 0
    %45 = vmatpush.msra.mxu0 0.0
    %46 = vmatpush.msra.mxu0 0.0
    %47 = vmatpush.msra.mxu0 0.0
    %48 = vmatpush.msra.mxu0 0.0
    %49 = vmatpush.msra.mxu0 0.0
    %50 = vmatpush.msra.mxu0 0.0
    %51 = vmatpush.msra.mxu0 0.0
    %52 = vmatpush.msra.mxu0 0.0
    %53 = vmatpush.msra.mxu0 0.0
    %54 = vmatpush.msra.mxu0 0.0
    %55 = vmatpush.msra.mxu0 0.0
    %56 = vmatpush.msra.mxu0 0.0
    %57 = vmatpush.msra.mxu0 %v33
    %58 = vmatpush.msra.mxu0 %v32
    %59 = vmatpush.msra.mxu0 %v31
    %60 = vmatpush.msra.mxu0 %v30
    %61 = vmatmul.f32.gmra.mxu0 %v40
    %v62 = vpop.f32.mrf.mxu0
    %v63 = vadd.f32 %v36, %v62
    %64 = vmatmul.f32.gmra.mxu0 %v43
    %v65 = vpop.f32.mrf.mxu0
    %v66 = vadd.f32 %v36, %v65
    %67 = vdwg.mxu0
    %v68 = vmul.f32 %v63, 0.5
    %v69 = vmul.f32 %v66, 0.5
    %v70 = vmul.f32 %v63, 0.044715
    %v71 = vmul.f32 %v66, 0.044715
    %v72 = vmul.f32 %v70, %v63
    %v73 = vmul.f32 %v71, %v66
    %v74 = vmul.f32 %v72, %v63
    %v75 = vmul.f32 %v73, %v66
    %v76 = vadd.f32 %v63, %v74
    %v77 = vadd.f32 %v66, %v75
    %v78 = vmul.f32 %v76, 0.7978846
    %v79 = vmul.f32 %v77, 0.7978846
    %v80 = vtanh.pop %v78
    %v81 = vtanh.pop %v79
    %v82 = vadd.f32 %v80, 1.0
    %v83 = vadd.f32 %v81, 1.0
    %v84 = vmul.f32 %v68, %v82
    %v85 = vmul.f32 %v69, %v83
    %v86 = vld [vmem:[#allocation2] sm:$0xff]
    %v87 = vld [vmem:[#allocation2 + $0x8] sm:$0xff]
    %v88 = vld [vmem:[%s3] sm:$0xff]
    %v89 = vld [vmem:[%s3 + $0x8] sm:$0xff]
    %v90 = vld [vmem:[%s3 + $0x10] sm:$0xff]
    %v91 = vld [vmem:[%s3 + $0x18] sm:$0xff]
    %v92 = vld [vmem:[%s3 + $0x20] sm:$0xff]
    %v93 = vld [vmem:[%s3 + $0x28] sm:$0xff]
    %v94 = vld [vmem:[%s3 + $0x30] sm:$0xff]
    %v95 = vld [vmem:[%s3 + $0x38] sm:$0xff]
    %v96 = vld [vmem:[%s3 + $0x40] sm:$0xff]
    %v97 = vld [vmem:[%s3 + $0x48] sm:$0xff]
    %v98 = vld [vmem:[%s3 + $0x50] sm:$0xff]
    %v99 = vld [vmem:[%s3 + $0x58] sm:$0xff]
    %v100 = vld [vmem:[%s3 + $0x60] sm:$0xff]
    %v101 = vld [vmem:[%s3 + $0x68] sm:$0xff]
    %v102 = vld [vmem:[%s3 + $0x70] sm:$0xff]
    %v103 = vld [vmem:[%s3 + $0x78] sm:$0xff]
    %104 = vmatpush.msra.mxu0 %v103
    %105 = vmatpush.msra.mxu0 %v102
    %106 = vmatpush.msra.mxu0 %v101
    %107 = vmatpush.msra.mxu0 %v100
    %108 = vmatpush.msra.mxu0 %v99
    %109 = vmatpush.msra.mxu0 %v98
    %110 = vmatpush.msra.mxu0 %v97
    %111 = vmatpush.msra.mxu0 %v96
    %112 = vmatpush.msra.mxu0 %v95
    %113 = vmatpush.msra.mxu0 %v94
    %114 = vmatpush.msra.mxu0 %v93
    %115 = vmatpush.msra.mxu0 %v92
    %116 = vmatpush.msra.mxu0 %v91
    %117 = vmatpush.msra.mxu0 %v90
    %118 = vmatpush.msra.mxu0 %v89
    %119 = vmatpush.msra.mxu0 %v88
    %120 = vmatmul.f32.gmra.mxu0 %v84
    %v121 = vpop.f32.mrf.mxu0
    %v122 = vadd.f32 0.0, %v121
    %123 = vmatmul.f32.gmra.mxu0 %v85
    %v124 = vpop.f32.mrf.mxu0
    %v125 = vadd.f32 0.0, %v124
    %126 = vdwg.mxu0
    %v127 = vadd.f32 %v86, %v122
    %v128 = vadd.f32 %v87, %v125
    %129 = vst.msk [vmem:[#allocation2] sm:$0xff] %vm38, %v127
    %130 = vst.msk [vmem:[#allocation2 + $0x8] sm:$0xff] %vm38, %v128
    // Predicated region
    $region26: #{tpu_custom_call.1} parent=1 // pred_check
      %p131 = pneg %p21
    $region27: #{tpu_custom_call.1} parent=1 // pred_check_branch
      %133 = sbr.rel (%p131) target = $region29
    $region28: #{tpu_custom_call.1} parent=1 // pred_region
      %v134 = vld [vmem:[#allocation2] sm:$0xff]
      %v135 = vld [vmem:[#allocation2 + $0x8] sm:$0xff]
      %v136 = vld [vmem:[%s4] sm:$0x1]
      %v138 = vperm.slane %v136, 0
      %v140 = vadd.f32 %v134, %v138
      %v141 = vadd.f32 %v135, %v138
      %142 = vst.msk [vmem:[#allocation3] sm:$0xff] %vm38, %v140
      %143 = vst.msk [vmem:[#allocation3 + $0x8] sm:$0xff] %vm38, %v141
    $region29: #{tpu_custom_call.1} parent=1 // pred_fallthru
      _
    // Predicated region
    $region30: #{tpu_custom_call.1} parent=1 // pred_check
      _
    $region31: #{tpu_custom_call.1} parent=1 // pred_check_branch
      %145 = sbr.rel (0) target = $region33
    $region32: #{tpu_custom_call.1} parent=1 // pred_region
      %147 = vsyncadd [#allocation4], 0
      %s148 = sshll.u32 [#allocation3], 4
      %s149 = int_to_ptr.vmem [resolvable:$true] %s148
      %s150 = sshll.u32 %s5, 4
      %s151 = int_to_ptr.hbm [resolvable:$true] %s150
      %156 = dma.vmem_to_hbm [thread:$0]  %s149, 256, %s151, [#allocation4], 128, 128, 8
    $region33: #{tpu_custom_call.1} parent=1 // pred_fallthru
      _
    // Predicated region
    $region34: #{tpu_custom_call.1} parent=1 // pred_check
      _
    $region35: #{tpu_custom_call.1} parent=1 // pred_check_branch
      %158 = sbr.rel (0) target = $region37
    $region36: #{tpu_custom_call.1} parent=1 // pred_region
      %160 = dma.done [#allocation4], 256
    $region37: #{tpu_custom_call.1} parent=1 // pred_fallthru
      _
    %161 = vsyncpa [#allocation4], 1

</llo_original>
